<compile_context>
chip_gen: v7x
topology: tpu7x:2x2x1
jax: 0.10.0
libtpu: 0.0.40
codegen_flags: <defaults>
</compile_context>

<pallas_src>
import functools

import jax
import jax.numpy as jnp
from jax.experimental import pallas as pl
from jax.experimental.pallas import tpu as pltpu


def _classifier_kernel(x_ref, w_ref, b_ref, o_ref, *, tb):
    # x_ref: (TB, C, TP)   w_ref: (nc, C)   b_ref: (nc, 1)   o_ref: (TB, nc, TP)
    w = w_ref[...]                                            # resident across grid
    nc, tp = o_ref.shape[1], o_ref.shape[2]
    bias_b = jnp.broadcast_to(b_ref[...], (nc, tp))           # hoisted, one broadcast

    def body(i, carry):
        # (nc, C) @ (C, TP) on the MXU with f32 accumulation.
        acc = jnp.dot(w, x_ref[i], preferred_element_type=jnp.float32) + bias_b
        o_ref[i] = acc.astype(o_ref.dtype)
        return carry

    jax.lax.fori_loop(0, tb, body, None, unroll=True)


def _round_up(x, m):
    return pl.cdiv(x, m) * m


def _chip_caps():
    """Per-generation tile / VMEM budgets.  Defaults to the conservative v7x
    numbers if the device kind cannot be determined."""
    kind = ""
    try:
        kind = jax.devices()[0].device_kind.lower()
    except Exception:  # pragma: no cover - defensive
        pass
    is_v7 = "v7" in kind
    if is_v7:
        # 64 MiB physical VMEM -> stay well below it.
        return dict(is_v7=True,
                    per_image_slab_bytes=4 << 20,
                    vmem_budget_bytes=20 << 20,
                    vmem_ceiling_bytes=40 << 20)
    # v5e / v6e: 128 MiB physical VMEM (scoped default 16/32 MiB -> raise it).
    return dict(is_v7=False,
                per_image_slab_bytes=8 << 20,
                vmem_budget_bytes=40 << 20,
                vmem_ceiling_bytes=96 << 20)


def linear_classifier_token(
    x,
    weight,
    bias,
    H,
    W,
    *,
    target_block_bytes=4 << 20,   # ~4 MiB of x per grid step
    max_unroll=8,                 # bound the in-kernel unrolled loop / compile time
):
    """
    x:      (B, T, C)  with T == H * W   (same as the PyTorch forward input)
    weight: (nc, C)    (Conv2d 1x1 weight squeezed from (nc, C, 1, 1))
    bias:   (nc,)
    returns (B, nc, H, W)
    """
    B, T, C = x.shape
    assert T == H * W, "num_tokens must equal tokenH * tokenW"
    nc = weight.shape[0]
    P = H * W
    itemsize = jnp.dtype(x.dtype).itemsize
    caps = _chip_caps()

    # Raw reshape identical to torch's x.reshape(-1, C, H, W), with H,W flattened.
    xr = x.reshape(B, C, P)
    bias2d = bias.reshape(nc, 1).astype(jnp.float32)

    # ---- pixel tile TP: prefer the whole row (no padding, contiguous DMA) ----
    if C * P * itemsize <= caps["per_image_slab_bytes"] or P <= 128:
        tp = P                          # full array dim -> (8,128) rule satisfied
        nsteps_p = 1
    else:
        # Tile the lane axis with tp a multiple of 128; no host padding — the
        # partial last block only touches lanes whose outputs Pallas discards.
        tp_cap = max(128, (caps["per_image_slab_bytes"] // max(C * itemsize, 1))
                     // 128 * 128)
        p128 = _round_up(P, 128)
        nsteps_p = pl.cdiv(p128, tp_cap)
        tp = _round_up(pl.cdiv(p128, nsteps_p), 128)   # over-pad <= 127 lanes
        nsteps_p = pl.cdiv(P, tp)

    # ---- batch tile TB: amortize per-step overhead within the VMEM budget ----
    x_blk_img_bytes = C * tp * itemsize
    o_blk_img_bytes = nc * tp * itemsize
    resident_bytes = (nc * C + nc) * 4

    def _tiles_bytes(tb_):
        # double-buffered x and out tiles + resident weight/bias
        return 2 * tb_ * (x_blk_img_bytes + o_blk_img_bytes) + resident_bytes

    tb = max(1, target_block_bytes // max(x_blk_img_bytes, 1))
    tb = min(tb, B, max_unroll)
    while tb > 1 and _tiles_bytes(tb) > caps["vmem_budget_bytes"]:
        tb -= 1

    # Only on v7x (2 TensorCores) force >= 2 grid steps so megacore sharding helps.
    if caps["is_v7"] and B >= 2 and nsteps_p * pl.cdiv(B, tb) < 2:
        tb = pl.cdiv(B, 2)
    tb = int(tb)
    nsteps_b = pl.cdiv(B, tb)

    vmem_limit = int(min(caps["vmem_ceiling_bytes"],
                         max(32 << 20, _tiles_bytes(tb) + (8 << 20))))

    cost = pl.CostEstimate(
        flops=2 * B * nc * C * P,
        transcendentals=0,
        bytes_accessed=(B * C * P + B * nc * P) * itemsize + resident_bytes,
    )

    out = pl.pallas_call(
        functools.partial(_classifier_kernel, tb=tb),
        out_shape=jax.ShapeDtypeStruct((B, nc, P), x.dtype),
        grid_spec=pltpu.PrefetchScalarGridSpec(
            num_scalar_prefetch=0,
            grid=(nsteps_b, nsteps_p),
            in_specs=[
                pl.BlockSpec((tb, C, tp), lambda b, p: (b, 0, p)),   # x tile
                pl.BlockSpec((nc, C), lambda b, p: (0, 0)),          # weight (resident)
                pl.BlockSpec((nc, 1), lambda b, p: (0, 0)),          # bias   (resident)
            ],
            out_specs=pl.BlockSpec((tb, nc, tp), lambda b, p: (b, 0, p)),
        ),
        compiler_params=pltpu.CompilerParams(
            dimension_semantics=("parallel", "parallel"),
            vmem_limit_bytes=vmem_limit,
        ),
        cost_estimate=cost,
    )(xr, weight, bias2d)

    return out.reshape(B, nc, H, W)


def _reference(x, weight, bias, H, W):
    B, T, C = x.shape
    xr = x.reshape(B, C, H, W)            # raw reshape, same as torch
    return jnp.einsum("oc,bchw->bohw", weight, xr) + bias[None, :, None, None]


if __name__ == "__main__":
    key = jax.random.PRNGKey(0)

    # Case 1: small shapes consistent with the module's forward (P multiple of 128).
    B, C, H, W, NC = 2, 32, 16, 16, 4
    T = H * W
    kx, kw, kb, key = jax.random.split(key, 4)
    x = jax.random.normal(kx, (B, T, C), dtype=jnp.float32)
    weight = jax.random.normal(kw, (NC, C), dtype=jnp.float32) * 0.05
    bias = jax.random.normal(kb, (NC,), dtype=jnp.float32) * 0.05

    out = jax.block_until_ready(linear_classifier_token(x, weight, bias, H, W))
    ref = _reference(x, weight, bias, H, W)
    assert out.shape == (B, NC, H, W)
    assert jnp.allclose(out, ref, atol=1e-5, rtol=1e-5), "mismatch vs reference (case 1)"

    # Case 2: P = 14*14 = 196 (not a multiple of 128) and odd batch — exercises
    # the full-P lane block and partial batch block (no host-side padding).
    B2, C2, H2, W2, NC2 = 3, 24, 14, 14, 5
    T2 = H2 * W2
    kx2, kw2, kb2, key = jax.random.split(key, 4)
    x2 = jax.random.normal(kx2, (B2, T2, C2), dtype=jnp.float32)
    weight2 = jax.random.normal(kw2, (NC2, C2), dtype=jnp.float32) * 0.05
    bias2 = jax.random.normal(kb2, (NC2,), dtype=jnp.float32) * 0.05

    out2 = jax.block_until_ready(linear_classifier_token(x2, weight2, bias2, H2, W2))
    ref2 = _reference(x2, weight2, bias2, H2, W2)
    assert out2.shape == (B2, NC2, H2, W2)
    assert jnp.allclose(out2, ref2, atol=1e-5, rtol=1e-5), "mismatch vs reference (case 2)"

    print("KERNEL_OK")
</pallas_src>

<mosaic_0001>
module attributes {stable_mosaic.version = 11 : i64} {
  func.func @_classifier_kernel(%arg0: i32, %arg1: i32, %arg2: memref<2x32x256xf32, #tpu.memory_space<vmem>>, %arg3: memref<4x32xf32, #tpu.memory_space<vmem>>, %arg4: memref<4x1xf32, #tpu.memory_space<vmem>>, %arg5: memref<2x4x256xf32, #tpu.memory_space<vmem>>) attributes {dimension_semantics = [#tpu.dimension_semantics<parallel>, #tpu.dimension_semantics<parallel>], iteration_bounds = array<i64: 1, 1>, scalar_prefetch = 0 : i64, scratch_operands = 0 : i64, tpu.core_type = #tpu.core_type<tc>, window_params = [{transform_indices = @transform_0, window_bounds = array<i64: 2, 32, 256>}, {pipeline_mode = #tpu.pipeline_mode<synchronous>, transform_indices = @transform_1, window_bounds = array<i64: 4, 32>}, {pipeline_mode = #tpu.pipeline_mode<synchronous>, transform_indices = @transform_2, window_bounds = array<i64: 4, 1>}, {transform_indices = @transform_3, window_bounds = array<i64: 2, 4, 256>}]} {
    %c0 = arith.constant 0 : index
    %c0_0 = arith.constant 0 : index
    %0 = vector.load %arg3[%c0, %c0_0] : memref<4x32xf32, #tpu.memory_space<vmem>>, vector<4x32xf32>
    %c0_1 = arith.constant 0 : index
    %c0_2 = arith.constant 0 : index
    %1 = vector.load %arg4[%c0_1, %c0_2] : memref<4x1xf32, #tpu.memory_space<vmem>>, vector<4x1xf32>
    %2 = vector.shape_cast %1 : vector<4x1xf32> to vector<4x1xf32>
    %3 = vector.broadcast %2 : vector<4x1xf32> to vector<4x256xf32>
    %c0_i32 = arith.constant 0 : i32
    %4 = arith.index_cast %c0_i32 : i32 to index
    %c0_3 = arith.constant 0 : index
    %c0_4 = arith.constant 0 : index
    %5 = vector.load %arg2[%4, %c0_3, %c0_4] : memref<2x32x256xf32, #tpu.memory_space<vmem>>, vector<1x32x256xf32>
    %6 = vector.shape_cast %5 : vector<1x32x256xf32> to vector<32x256xf32>
    %cst = arith.constant dense<0.000000e+00> : vector<4x256xf32>
    %7 = tpu.matmul %0, %6, %cst {dimension_numbers = #tpu.dot_dimension_numbers<[1], [0], [0], [1], [0, 0, 1, 1], [], []>} : vector<4x32xf32>, vector<32x256xf32>, vector<4x256xf32> -> vector<4x256xf32>
    %8 = arith.addf %7, %3 : vector<4x256xf32>
    %9 = arith.index_cast %c0_i32 : i32 to index
    %c0_5 = arith.constant 0 : index
    %c0_6 = arith.constant 0 : index
    %10 = vector.load %arg5[%9, %c0_5, %c0_6] : memref<2x4x256xf32, #tpu.memory_space<vmem>>, vector<1x4x256xf32>
    %11 = vector.shape_cast %10 : vector<1x4x256xf32> to vector<4x256xf32>
    %12 = vector.shape_cast %8 : vector<4x256xf32> to vector<1x4x256xf32>
    tpu.vector_store %arg5[%9, %c0_5, %c0_6], %12 {strides = array<i32>} : memref<2x4x256xf32, #tpu.memory_space<vmem>>, vector<1x4x256xf32>,
    %c1_i32 = arith.constant 1 : i32
    %13 = arith.index_cast %c1_i32 : i32 to index
    %c0_7 = arith.constant 0 : index
    %c0_8 = arith.constant 0 : index
    %14 = vector.load %arg2[%13, %c0_7, %c0_8] : memref<2x32x256xf32, #tpu.memory_space<vmem>>, vector<1x32x256xf32>
    %15 = vector.shape_cast %14 : vector<1x32x256xf32> to vector<32x256xf32>
    %cst_9 = arith.constant dense<0.000000e+00> : vector<4x256xf32>
    %16 = tpu.matmul %0, %15, %cst_9 {dimension_numbers = #tpu.dot_dimension_numbers<[1], [0], [0], [1], [0, 0, 1, 1], [], []>} : vector<4x32xf32>, vector<32x256xf32>, vector<4x256xf32> -> vector<4x256xf32>
    %17 = arith.addf %16, %3 : vector<4x256xf32>
    %18 = arith.index_cast %c1_i32 : i32 to index
    %c0_10 = arith.constant 0 : index
    %c0_11 = arith.constant 0 : index
    %19 = vector.load %arg5[%18, %c0_10, %c0_11] : memref<2x4x256xf32, #tpu.memory_space<vmem>>, vector<1x4x256xf32>
    %20 = vector.shape_cast %19 : vector<1x4x256xf32> to vector<4x256xf32>
    %21 = vector.shape_cast %17 : vector<4x256xf32> to vector<1x4x256xf32>
    tpu.vector_store %arg5[%18, %c0_10, %c0_11], %21 {strides = array<i32>} : memref<2x4x256xf32, #tpu.memory_space<vmem>>, vector<1x4x256xf32>,
    %c2_i32 = arith.constant 2 : i32
    return
  }
  func.func @transform_0(%arg0: i32, %arg1: i32) -> (i32, i32, i32) {
    %c0_i32 = arith.constant 0 : i32
    %c0_i32_0 = arith.constant 0 : i32
    return %arg0, %c0_i32, %arg1 : i32, i32, i32
  }
  func.func @transform_1(%arg0: i32, %arg1: i32) -> (i32, i32) {
    %c0_i32 = arith.constant 0 : i32
    %c0_i32_0 = arith.constant 0 : i32
    %c0_i32_1 = arith.constant 0 : i32
    return %c0_i32, %c0_i32_0 : i32, i32
  }
  func.func @transform_2(%arg0: i32, %arg1: i32) -> (i32, i32) {
    %c0_i32 = arith.constant 0 : i32
    %c0_i32_0 = arith.constant 0 : i32
    %c0_i32_1 = arith.constant 0 : i32
    return %c0_i32, %c0_i32_0 : i32, i32
  }
  func.func @transform_3(%arg0: i32, %arg1: i32) -> (i32, i32, i32) {
    %c0_i32 = arith.constant 0 : i32
    %c0_i32_0 = arith.constant 0 : i32
    return %arg0, %c0_i32, %arg1 : i32, i32, i32
  }
}

</mosaic_0001>

<llo_original>
// kernel: tpu_custom_call.1
$region0: #{tpu_custom_call.1}
  #allocation0 [shape = 'u32[]', space=smem, size = 0x4, offset = 0x4, fixed_abs, tag = 'smem constant byte address 0x4 - core index']
  #allocation1 [shape = 'u32[144,128]{1,0:T(1,128)}', space=vmem, size = 0x12000, scoped, tag = 'internal scratch']
  %s0 = inlined_call_operand.hbm [shape: f32[2,32,256], index: 0, kind: input, shape index: {}]
  %s1 = inlined_call_operand.vmem [shape: f32[4,32], index: 1, kind: input, shape index: {}]
  %s2 = inlined_call_operand.vmem [shape: f32[4,1], index: 2, kind: input, shape index: {}]
  %s3 = inlined_call_operand.hbm [shape: f32[2,4,256], index: 3, kind: output, shape index: {}]
  %s4 = sld [smem:[#allocation0]]
  $region26: #{tpu_custom_call.1} parent=0
    _
  %s6 = ssub.s32 1, %s4
  %s7 = scalar_select 0, %s6, %s4
  $region1: #{tpu_custom_call.1} parent=0
    #allocation2 [shape = 'u8[65536]{0}', space=vmem, size = 0x10000, scoped, tag = 'input window, operand 0, single buffered']
    #allocation3 [shape = 's32[1]{0}', space=sflag, size = 0x4, scoped, tag = 'scoped memory for tpu_custom_call.1']
    #allocation4 [shape = 's32[1]{0}', space=sflag, size = 0x4, scoped, tag = 'scoped memory for tpu_custom_call.1']
    #allocation5 [shape = 'u8[8192]{0}', space=vmem, size = 0x2000, scoped, tag = 'output window, operand 0, single buffered']
    %8 = vsyncpa [#allocation3], 0
    %9 = vsyncpa [#allocation4], 0
    // Predicated region
    $region2: #{tpu_custom_call.1} parent=1 // pred_check
      _
    $region3: #{tpu_custom_call.1} parent=1 // pred_check_branch
      %11 = sbr.rel (0) target = $region5
    $region4: #{tpu_custom_call.1} parent=1 // pred_region
      %s13 = ssub.s32 2048, 2048
      %14 = vsyncadd [#allocation3], %s13
      %s15 = sshll.u32 [#allocation2], 4
      %s16 = int_to_ptr.vmem [resolvable:$true] %s15
      %21 = dma.hbm_to_vmem [thread:$0]  %s0, 2048, %s16, [#allocation3], 256, 256, 16
    $region5: #{tpu_custom_call.1} parent=1 // pred_fallthru
      _
    // Predicated region
    $region6: #{tpu_custom_call.1} parent=1 // pred_check
      _
    $region7: #{tpu_custom_call.1} parent=1 // pred_check_branch
      %23 = sbr.rel (0) target = $region9
    $region8: #{tpu_custom_call.1} parent=1 // pred_region
      _
    $region9: #{tpu_custom_call.1} parent=1 // pred_fallthru
      _
    // Predicated region
    $region10: #{tpu_custom_call.1} parent=1 // pred_check
      _
    $region11: #{tpu_custom_call.1} parent=1 // pred_check_branch
      %25 = sbr.rel (0) target = $region13
    $region12: #{tpu_custom_call.1} parent=1 // pred_region
      _
    $region13: #{tpu_custom_call.1} parent=1 // pred_fallthru
      _
    // Predicated region
    $region14: #{tpu_custom_call.1} parent=1 // pred_check
      _
    $region15: #{tpu_custom_call.1} parent=1 // pred_check_branch
      %27 = sbr.rel (0) target = $region17
    $region16: #{tpu_custom_call.1} parent=1 // pred_region
      %28 = dma.done [#allocation3], 2048
    $region17: #{tpu_custom_call.1} parent=1 // pred_fallthru
      _
    %v29 = vld [vmem:[%s1] sm:$0xf]
    %v30 = vld [vmem:[%s2] sm:$0xf]
    %32 = vset.pattern.permute.xlu0 0
    %33 = vperm.xlu0 %32, %v30
    %v34 = vpop.permute.xlu0 %33
    %v36 = vld [vmem:[#allocation2] sm:$0xff]
    %v37 = vld [vmem:[#allocation2 + $0x8] sm:$0xff]
    %v38 = vld [vmem:[#allocation2 + $0x10] sm:$0xff]
    %v39 = vld [vmem:[#allocation2 + $0x18] sm:$0xff]
    %v40 = vld [vmem:[#allocation2 + $0x20] sm:$0xff]
    %v41 = vld [vmem:[#allocation2 + $0x28] sm:$0xff]
    %v42 = vld [vmem:[#allocation2 + $0x30] sm:$0xff]
    %v43 = vld [vmem:[#allocation2 + $0x38] sm:$0xff]
    %vm44 = vcmask 261120
    %v46 = vsel %vm44, %v29, 0
    %48 = vmatprep.subr.mxu0 %v37
    %49 = vmatpush1.msra.mxu0 %v36
    %50 = vmatprep.subr.mxu0 %v39
    %51 = vmatpush1.msra.mxu0 %v38
    %52 = vmatprep.subr.mxu0 %v41
    %53 = vmatpush1.msra.mxu0 %v40
    %54 = vmatprep.subr.mxu0 %v43
    %55 = vmatpush1.msra.mxu0 %v42
    %56 = vmatprep.subr.mxu0 0.0
    %57 = vmatpush1.msra.mxu0 0.0
    %58 = vmatprep.subr.mxu0 0.0
    %59 = vmatpush1.msra.mxu0 0.0
    %60 = vmatprep.subr.mxu0 0.0
    %61 = vmatpush1.msra.mxu0 0.0
    %62 = vmatprep.subr.mxu0 0.0
    %63 = vmatpush1.msra.mxu0 0.0
    %64 = vmatprep.subr.mxu0 0.0
    %65 = vmatpush1.msra.mxu0 0.0
    %66 = vmatprep.subr.mxu0 0.0
    %67 = vmatpush1.msra.mxu0 0.0
    %68 = vmatprep.subr.mxu0 0.0
    %69 = vmatpush1.msra.mxu0 0.0
    %70 = vmatprep.subr.mxu0 0.0
    %71 = vmatpush1.msra.mxu0 0.0
    %72 = vmatprep.subr.mxu0 0.0
    %73 = vmatpush1.msra.mxu0 0.0
    %74 = vmatprep.subr.mxu0 0.0
    %75 = vmatpush1.msra.mxu0 0.0
    %76 = vmatprep.subr.mxu0 0.0
    %77 = vmatpush1.msra.mxu0 0.0
    %78 = vmatprep.subr.mxu0 0.0
    %79 = vmatpush1.msra.mxu0 0.0
    %80 = vmatprep.subr.mxu0 0.0
    %81 = vmatpush1.msra.mxu0 0.0
    %82 = vmatprep.subr.mxu0 0.0
    %83 = vmatpush1.msra.mxu0 0.0
    %84 = vmatprep.subr.mxu0 0.0
    %85 = vmatpush1.msra.mxu0 0.0
    %86 = vmatprep.subr.mxu0 0.0
    %87 = vmatpush1.msra.mxu0 0.0
    %88 = vmatprep.subr.mxu0 0.0
    %89 = vmatpush1.msra.mxu0 0.0
    %90 = vmatprep.subr.mxu0 0.0
    %91 = vmatpush1.msra.mxu0 0.0
    %92 = vmatprep.subr.mxu0 0.0
    %93 = vmatpush1.msra.mxu0 0.0
    %94 = vmatprep.subr.mxu0 0.0
    %95 = vmatpush1.msra.mxu0 0.0
    %96 = vmatprep.subr.mxu0 0.0
    %97 = vmatpush1.msra.mxu0 0.0
    %98 = vmatprep.subr.mxu0 0.0
    %99 = vmatpush1.msra.mxu0 0.0
    %100 = vmatprep.subr.mxu0 0.0
    %101 = vmatpush1.msra.mxu0 0.0
    %102 = vmatprep.subr.mxu0 0.0
    %103 = vmatpush1.msra.mxu0 0.0
    %104 = vmatprep.subr.mxu0 0.0
    %105 = vmatpush1.msra.mxu0 0.0
    %106 = vmatprep.subr.mxu0 0.0
    %107 = vmatpush1.msra.mxu0 0.0
    %108 = vmatprep.subr.mxu0 0.0
    %109 = vmatpush1.msra.mxu0 0.0
    %110 = vmatprep.subr.mxu0 0.0
    %111 = vmatpush1.msra.mxu0 0.0
    %112 = vmatprep.mubr.f32.mxu0 0.0
    %113 = vmatmul.mubr.f32.gmra.mrb[0].mxu0 %v46
    %v114 = vpop.f32.mrb[0].mxu0
    %v115 = vadd.f32 %v34, %v114
    %v116 = vpop.f32.mrb[0].mxu0
    %v117 = vadd.f32 %v34, %v116
    %118 = vdwg.mxu0
    %v121 = vcombine.low %v115, %v117
    %123 = vst [vmem:[#allocation5] sm:$0xff] %v121
    %s124 = scalar_lea.vmem [#allocation2], 64
    %v125 = vld [vmem:[%s124] sm:$0xff]
    %v126 = vld [vmem:[%s124 + $0x8] sm:$0xff]
    %v127 = vld [vmem:[%s124 + $0x10] sm:$0xff]
    %v128 = vld [vmem:[%s124 + $0x18] sm:$0xff]
    %v129 = vld [vmem:[%s124 + $0x20] sm:$0xff]
    %v130 = vld [vmem:[%s124 + $0x28] sm:$0xff]
    %v131 = vld [vmem:[%s124 + $0x30] sm:$0xff]
    %v132 = vld [vmem:[%s124 + $0x38] sm:$0xff]
    %133 = vmatprep.subr.mxu0 %v126
    %134 = vmatpush1.msra.mxu0 %v125
    %135 = vmatprep.subr.mxu0 %v128
    %136 = vmatpush1.msra.mxu0 %v127
    %137 = vmatprep.subr.mxu0 %v130
    %138 = vmatpush1.msra.mxu0 %v129
    %139 = vmatprep.subr.mxu0 %v132
    %140 = vmatpush1.msra.mxu0 %v131
    %141 = vmatprep.subr.mxu0 0.0
    %142 = vmatpush1.msra.mxu0 0.0
    %143 = vmatprep.subr.mxu0 0.0
    %144 = vmatpush1.msra.mxu0 0.0
    %145 = vmatprep.subr.mxu0 0.0
    %146 = vmatpush1.msra.mxu0 0.0
    %147 = vmatprep.subr.mxu0 0.0
    %148 = vmatpush1.msra.mxu0 0.0
    %149 = vmatprep.subr.mxu0 0.0
    %150 = vmatpush1.msra.mxu0 0.0
    %151 = vmatprep.subr.mxu0 0.0
    %152 = vmatpush1.msra.mxu0 0.0
    %153 = vmatprep.subr.mxu0 0.0
    %154 = vmatpush1.msra.mxu0 0.0
    %155 = vmatprep.subr.mxu0 0.0
    %156 = vmatpush1.msra.mxu0 0.0
    %157 = vmatprep.subr.mxu0 0.0
    %158 = vmatpush1.msra.mxu0 0.0
    %159 = vmatprep.subr.mxu0 0.0
    %160 = vmatpush1.msra.mxu0 0.0
    %161 = vmatprep.subr.mxu0 0.0
    %162 = vmatpush1.msra.mxu0 0.0
    %163 = vmatprep.subr.mxu0 0.0
    %164 = vmatpush1.msra.mxu0 0.0
    %165 = vmatprep.subr.mxu0 0.0
    %166 = vmatpush1.msra.mxu0 0.0
    %167 = vmatprep.subr.mxu0 0.0
    %168 = vmatpush1.msra.mxu0 0.0
    %169 = vmatprep.subr.mxu0 0.0
    %170 = vmatpush1.msra.mxu0 0.0
    %171 = vmatprep.subr.mxu0 0.0
    %172 = vmatpush1.msra.mxu0 0.0
    %173 = vmatprep.subr.mxu0 0.0
    %174 = vmatpush1.msra.mxu0 0.0
    %175 = vmatprep.subr.mxu0 0.0
    %176 = vmatpush1.msra.mxu0 0.0
    %177 = vmatprep.subr.mxu0 0.0
    %178 = vmatpush1.msra.mxu0 0.0
    %179 = vmatprep.subr.mxu0 0.0
    %180 = vmatpush1.msra.mxu0 0.0
    %181 = vmatprep.subr.mxu0 0.0
    %182 = vmatpush1.msra.mxu0 0.0
    %183 = vmatprep.subr.mxu0 0.0
    %184 = vmatpush1.msra.mxu0 0.0
    %185 = vmatprep.subr.mxu0 0.0
    %186 = vmatpush1.msra.mxu0 0.0
    %187 = vmatprep.subr.mxu0 0.0
    %188 = vmatpush1.msra.mxu0 0.0
    %189 = vmatprep.subr.mxu0 0.0
    %190 = vmatpush1.msra.mxu0 0.0
    %191 = vmatprep.subr.mxu0 0.0
    %192 = vmatpush1.msra.mxu0 0.0
    %193 = vmatprep.subr.mxu0 0.0
    %194 = vmatpush1.msra.mxu0 0.0
    %195 = vmatprep.subr.mxu0 0.0
    %196 = vmatpush1.msra.mxu0 0.0
    %197 = vmatprep.mubr.f32.mxu0 0.0
    %198 = vmatmul.mubr.f32.gmra.mrb[0].mxu0 %v46
    %v199 = vpop.f32.mrb[0].mxu0
    %v200 = vadd.f32 %v34, %v199
    %v201 = vpop.f32.mrb[0].mxu0
    %v202 = vadd.f32 %v34, %v201
    %203 = vdwg.mxu0
    %v206 = vcombine.low %v200, %v202
    %s208 = scalar_lea.vmem [#allocation5], 8
    %209 = vst [vmem:[%s208] sm:$0xff] %v206
    // Predicated region
    $region18: #{tpu_custom_call.1} parent=1 // pred_check
      _
    $region19: #{tpu_custom_call.1} parent=1 // pred_check_branch
      %211 = sbr.rel (0) target = $region21
    $region20: #{tpu_custom_call.1} parent=1 // pred_region
      %s213 = ssub.s32 256, 256
      %214 = vsyncadd [#allocation4], %s213
      %s215 = sshll.u32 [#allocation5], 4
      %s216 = int_to_ptr.vmem [resolvable:$true] %s215
      %221 = dma.vmem_to_hbm [thread:$0]  %s216, 256, %s3, [#allocation4], 128, 128, 8
    $region21: #{tpu_custom_call.1} parent=1 // pred_fallthru
      _
    // Predicated region
    $region22: #{tpu_custom_call.1} parent=1 // pred_check
      _
    $region23: #{tpu_custom_call.1} parent=1 // pred_check_branch
      %223 = sbr.rel (0) target = $region25
    $region24: #{tpu_custom_call.1} parent=1 // pred_region
      %224 = dma.done [#allocation4], 256
    $region25: #{tpu_custom_call.1} parent=1 // pred_fallthru
      _
    %225 = vsyncpa [#allocation3], 1
    %226 = vsyncpa [#allocation4], 1

</llo_original>
